<compile_context>
chip_gen: v5e
topology: v5e:2x2
jax: 0.10.0
libtpu: 0.0.40
codegen_flags: <defaults>
</compile_context>

<pallas_src>
import jax
import jax.numpy as jnp
from jax.experimental import pallas as pl
from jax.experimental.pallas import tpu as pltpu


_VMEM_LIMIT = 48 * 1024 * 1024  # > 32 MiB default (v5e/v6e), < 64 MiB physical (v7x)


# ----------------------------------------------------------------------------
# helpers: padding / tile selection
# ----------------------------------------------------------------------------
def _round_up(x, m):
    return ((x + m - 1) // m) * m


def _pick_tile(dim, cap=512):
    """Largest power-of-two tile in [128, cap] that does not overshoot dim badly."""
    t = 128
    while t * 2 <= cap and t * 2 <= _round_up(dim, 128):
        t *= 2
    return t


# ----------------------------------------------------------------------------
# kernel 1: H = X @ W^T + b   (grid = (M, F_out, F_in) blocks)
# ----------------------------------------------------------------------------
def _linear_kernel(x_ref, wt_ref, b_ref, h_ref, acc_ref):
    k = pl.program_id(2)

    @pl.when(k == 0)
    def _():
        acc_ref[...] = jnp.zeros_like(acc_ref)

    acc_ref[...] += jnp.dot(x_ref[...], wt_ref[...],
                            preferred_element_type=jnp.float32)

    @pl.when(k == pl.num_programs(2) - 1)
    def _():
        # bias added exactly once, after the full F_in reduction
        h_ref[...] = (acc_ref[...] + b_ref[...]).astype(h_ref.dtype)


def _linear_pallas(x_p, wt_p, b_p, t_nodes, t_fin, t_fout):
    n_pad, fin_pad = x_p.shape
    fout_pad = wt_p.shape[1]
    grid = (n_pad // t_nodes, fout_pad // t_fout, fin_pad // t_fin)
    return pl.pallas_call(
        _linear_kernel,
        out_shape=jax.ShapeDtypeStruct((n_pad, fout_pad), jnp.bfloat16),
        grid_spec=pltpu.PrefetchScalarGridSpec(
            num_scalar_prefetch=0,
            grid=grid,
            in_specs=[
                pl.BlockSpec((t_nodes, t_fin), lambda i, j, k: (i, k)),
                pl.BlockSpec((t_fin, t_fout), lambda i, j, k: (k, j)),
                pl.BlockSpec((1, t_fout), lambda i, j, k: (0, j)),
            ],
            out_specs=pl.BlockSpec((t_nodes, t_fout), lambda i, j, k: (i, j)),
            scratch_shapes=[pltpu.VMEM((t_nodes, t_fout), jnp.float32)],
        ),
        compiler_params=pltpu.CompilerParams(
            dimension_semantics=("parallel", "parallel", "arbitrary"),
            vmem_limit_bytes=_VMEM_LIMIT,
        ),
    )(x_p, wt_p, b_p)


# ----------------------------------------------------------------------------
# kernel 2: OUT = A @ H with block-CSR sparsity over A's column blocks
#   grid = (row blocks of A, F_out blocks, max nonzero A-col-blocks per row)
#   col_ids/counts are scalar-prefetched into SMEM and drive the index_maps.
# ----------------------------------------------------------------------------
def _spmm_kernel(col_ids_ref, counts_ref, a_ref, h_ref, o_ref, acc_ref):
    del col_ids_ref  # only used inside the index_maps
    i = pl.program_id(0)
    s = pl.program_id(2)

    @pl.when(s == 0)
    def _():
        acc_ref[...] = jnp.zeros_like(acc_ref)

    @pl.when(s < counts_ref[i])  # skip padded (all-zero) A blocks: no MXU work
    def _():
        acc_ref[...] += jnp.dot(a_ref[...], h_ref[...],
                                preferred_element_type=jnp.float32)

    @pl.when(s == pl.num_programs(2) - 1)
    def _():
        o_ref[...] = acc_ref[...].astype(o_ref.dtype)


def _spmm_pallas(col_ids, counts, a_p, h_p, t_nodes, t_fout, max_blocks):
    n_pad = a_p.shape[0]
    fout_pad = h_p.shape[1]
    grid = (n_pad // t_nodes, fout_pad // t_fout, max_blocks)
    return pl.pallas_call(
        _spmm_kernel,
        out_shape=jax.ShapeDtypeStruct((n_pad, fout_pad), jnp.float32),
        grid_spec=pltpu.PrefetchScalarGridSpec(
            num_scalar_prefetch=2,  # col_ids, counts -> SMEM, passed to index_maps
            grid=grid,
            in_specs=[
                pl.BlockSpec((t_nodes, t_nodes),
                             lambda i, j, s, ci, cn: (i, ci[i, s])),
                pl.BlockSpec((t_nodes, t_fout),
                             lambda i, j, s, ci, cn: (ci[i, s], j)),
            ],
            out_specs=pl.BlockSpec((t_nodes, t_fout),
                                   lambda i, j, s, ci, cn: (i, j)),
            scratch_shapes=[pltpu.VMEM((t_nodes, t_fout), jnp.float32)],
        ),
        compiler_params=pltpu.CompilerParams(
            dimension_semantics=("parallel", "parallel", "arbitrary"),
            vmem_limit_bytes=_VMEM_LIMIT,
        ),
    )(col_ids, counts, a_p, h_p)


# ----------------------------------------------------------------------------
# host-side index glue (edge list -> normalized adjacency -> block-CSR)
# ----------------------------------------------------------------------------
def build_normalized_adjacency(edge_index, num_nodes):
    """Replicates _augment_edge_index + symmetric normalization, dense [N,N]."""
    src, dst = edge_index[0], edge_index[1]
    loops = jnp.arange(num_nodes, dtype=edge_index.dtype)
    src_aug = jnp.concatenate([src, dst, loops])
    dst_aug = jnp.concatenate([dst, src, loops])
    deg = jnp.zeros((num_nodes,), jnp.float32).at[src_aug].add(1.0)
    deg = jnp.maximum(deg, 1.0)
    norm = jax.lax.rsqrt(deg[src_aug]) * jax.lax.rsqrt(deg[dst_aug])
    a = jnp.zeros((num_nodes, num_nodes), jnp.float32).at[dst_aug, src_aug].add(norm)
    return a


def _build_block_csr(a_pad, tile_m, tile_k):
    """Per row-block compacted list of nonzero column-block indices + counts."""
    nb_m = a_pad.shape[0] // tile_m
    nb_k = a_pad.shape[1] // tile_k
    blk = a_pad.reshape(nb_m, tile_m, nb_k, tile_k)
    nz = jnp.any(blk != 0.0, axis=(1, 3))                       # [nb_m, nb_k]
    counts = jnp.sum(nz, axis=1).astype(jnp.int32)              # [nb_m]
    # static grid extent -> needs concrete adjacency (not traced under jit)
    max_blocks = max(int(jnp.max(counts)), 1)
    order = jnp.argsort(jnp.logical_not(nz).astype(jnp.int32),
                        axis=1, stable=True).astype(jnp.int32)  # nonzero cols first
    col_ids = order[:, :max_blocks]
    pos = jnp.arange(max_blocks, dtype=jnp.int32)[None, :]
    last = jnp.take_along_axis(col_ids, jnp.maximum(counts - 1, 0)[:, None], axis=1)
    # pad tail with the last valid column so skipped steps re-use the resident
    # A/H blocks (no extra DMA); the pl.when(s < counts) guard masks the compute.
    col_ids = jnp.where(pos < counts[:, None], col_ids, last)
    return col_ids, counts, max_blocks


# ----------------------------------------------------------------------------
# full layer
# ----------------------------------------------------------------------------
def gcn_layer_pallas(x, edge_index, weight, bias):
    """x: [N,Fin] f32, edge_index: [2,E] int32, weight: [Fout,Fin], bias: [Fout]."""
    n, f_in = x.shape
    f_out = weight.shape[0]

    # tile selection & lane-dense padding
    t_nodes = _pick_tile(n)
    t_fin = _pick_tile(f_in)
    t_fout = _pick_tile(f_out)
    n_pad = _round_up(n, t_nodes)
    fin_pad = _round_up(f_in, t_fin)
    fout_pad = _round_up(f_out, t_fout)

    # normalized adjacency + block sparsity structure (host-side index glue)
    a = build_normalized_adjacency(edge_index, n)
    a_p = jnp.zeros((n_pad, n_pad), jnp.float32).at[:n, :n].set(a)
    col_ids, counts, max_blocks = _build_block_csr(a_p, t_nodes, t_nodes)

    # bf16 operands for the MXU, f32 accumulation inside the kernels
    a_bf = a_p.astype(jnp.bfloat16)
    x_p = jnp.zeros((n_pad, fin_pad), jnp.bfloat16).at[:n, :f_in].set(
        x.astype(jnp.bfloat16))
    wt_p = jnp.zeros((fin_pad, fout_pad), jnp.bfloat16).at[:f_in, :f_out].set(
        weight.T.astype(jnp.bfloat16))
    b_p = jnp.zeros((1, fout_pad), jnp.float32).at[0, :f_out].set(bias)

    h = _linear_pallas(x_p, wt_p, b_p, t_nodes, t_fin, t_fout)          # bf16
    out = _spmm_pallas(col_ids, counts, a_bf, h, t_nodes, t_fout, max_blocks)
    return out[:n, :f_out]


# ----------------------------------------------------------------------------
# pure-JAX reference (mirrors the PyTorch forward literally, in f32)
# ----------------------------------------------------------------------------
def gcn_reference(x, edge_index, weight, bias):
    n = x.shape[0]
    src, dst = edge_index[0], edge_index[1]
    loops = jnp.arange(n, dtype=edge_index.dtype)
    src_aug = jnp.concatenate([src, dst, loops])
    dst_aug = jnp.concatenate([dst, src, loops])
    deg = jnp.zeros((n,), jnp.float32).at[src_aug].add(1.0)
    deg = jnp.maximum(deg, 1.0)
    norm = (jax.lax.rsqrt(deg[src_aug]) * jax.lax.rsqrt(deg[dst_aug]))[:, None]
    h = x @ weight.T + bias
    msg = h[src_aug] * norm
    return jnp.zeros_like(h).at[dst_aug].add(msg)


if __name__ == "__main__":
    key = jax.random.PRNGKey(0)
    k_x, k_w, k_b, k_e = jax.random.split(key, 4)

    N = 16          # number of graph nodes
    F_IN = 16       # in_features
    F_OUT = 32      # out_features
    E = 24          # number of (directed) input edges

    x = jax.random.normal(k_x, (N, F_IN), dtype=jnp.float32)
    edge_index = jax.random.randint(k_e, (2, E), 0, N, dtype=jnp.int32)

    # Deterministic nn.Linear-style init: U(-1/sqrt(F_IN), 1/sqrt(F_IN))
    bound = 1.0 / (F_IN ** 0.5)
    weight = jax.random.uniform(k_w, (F_OUT, F_IN), jnp.float32, -bound, bound)
    bias = jax.random.uniform(k_b, (F_OUT,), jnp.float32, -bound, bound)

    out = jax.block_until_ready(gcn_layer_pallas(x, edge_index, weight, bias))
    ref = jax.block_until_ready(gcn_reference(x, edge_index, weight, bias))

    assert out.shape == (N, F_OUT)
    # bf16 operands vs f32 reference -> loosened tolerance (per review note)
    assert jnp.allclose(out, ref, atol=5e-2, rtol=5e-2), float(
        jnp.max(jnp.abs(out - ref)))

    print("KERNEL_OK")
</pallas_src>

<mosaic_0001>
module attributes {stable_mosaic.version = 11 : i64} {
  func.func @_linear_kernel(%arg0: i32, %arg1: i32, %arg2: i32, %arg3: memref<128x128xbf16, #tpu.memory_space<vmem>>, %arg4: memref<128x128xbf16, #tpu.memory_space<vmem>>, %arg5: memref<1x128xf32, #tpu.memory_space<vmem>>, %arg6: memref<128x128xbf16, #tpu.memory_space<vmem>>, %arg7: memref<128x128xf32, #tpu.memory_space<vmem>>) attributes {dimension_semantics = [#tpu.dimension_semantics<parallel>, #tpu.dimension_semantics<parallel>, #tpu.dimension_semantics<arbitrary>], iteration_bounds = array<i64: 1, 1, 1>, scalar_prefetch = 0 : i64, scratch_operands = 1 : i64, tpu.core_type = #tpu.core_type<tc>, window_params = [{transform_indices = @transform_0, window_bounds = array<i64: 128, 128>}, {transform_indices = @transform_1, window_bounds = array<i64: 128, 128>}, {transform_indices = @transform_2, window_bounds = array<i64: 1, 128>}, {transform_indices = @transform_3, window_bounds = array<i64: 128, 128>}]} {
    %c0_i32 = arith.constant 0 : i32
    %0 = arith.cmpi eq, %arg2, %c0_i32 : i32
    %1 = arith.extui %0 : i1 to i32
    %c0_i32_0 = arith.constant 0 : i32
    %2 = arith.cmpi ne, %1, %c0_i32_0 : i32
    scf.if %2 {
      %cst_10 = arith.constant 0.000000e+00 : f32
      %12 = vector.broadcast %cst_10 : f32 to vector<128x128xf32>
      %c0_11 = arith.constant 0 : index
      %c0_12 = arith.constant 0 : index
      %13 = vector.load %arg7[%c0_11, %c0_12] : memref<128x128xf32, #tpu.memory_space<vmem>>, vector<128x128xf32>
      tpu.vector_store %arg7[%c0_11, %c0_12], %12 {strides = array<i32>} : memref<128x128xf32, #tpu.memory_space<vmem>>, vector<128x128xf32>,
    } else {
    }
    %c0 = arith.constant 0 : index
    %c0_1 = arith.constant 0 : index
    %3 = vector.load %arg7[%c0, %c0_1] : memref<128x128xf32, #tpu.memory_space<vmem>>, vector<128x128xf32>
    %c0_2 = arith.constant 0 : index
    %c0_3 = arith.constant 0 : index
    %4 = vector.load %arg3[%c0_2, %c0_3] : memref<128x128xbf16, #tpu.memory_space<vmem>>, vector<128x128xbf16>
    %c0_4 = arith.constant 0 : index
    %c0_5 = arith.constant 0 : index
    %5 = vector.load %arg4[%c0_4, %c0_5] : memref<128x128xbf16, #tpu.memory_space<vmem>>, vector<128x128xbf16>
    %cst = arith.constant dense<0.000000e+00> : vector<128x128xf32>
    %6 = tpu.matmul %4, %5, %cst {dimension_numbers = #tpu.dot_dimension_numbers<[1], [0], [0], [1], [0, 0, 1, 1], [], []>} : vector<128x128xbf16>, vector<128x128xbf16>, vector<128x128xf32> -> vector<128x128xf32>
    %7 = arith.addf %3, %6 : vector<128x128xf32>
    %c0_6 = arith.constant 0 : index
    %c0_7 = arith.constant 0 : index
    %8 = vector.load %arg7[%c0_6, %c0_7] : memref<128x128xf32, #tpu.memory_space<vmem>>, vector<128x128xf32>
    tpu.vector_store %arg7[%c0_6, %c0_7], %7 {strides = array<i32>} : memref<128x128xf32, #tpu.memory_space<vmem>>, vector<128x128xf32>,
    %c0_i32_8 = arith.constant 0 : i32
    %9 = arith.cmpi eq, %arg2, %c0_i32_8 : i32
    %10 = arith.extui %9 : i1 to i32
    %c0_i32_9 = arith.constant 0 : i32
    %11 = arith.cmpi ne, %10, %c0_i32_9 : i32
    scf.if %11 {
      %c0_10 = arith.constant 0 : index
      %c0_11 = arith.constant 0 : index
      %12 = vector.load %arg7[%c0_10, %c0_11] : memref<128x128xf32, #tpu.memory_space<vmem>>, vector<128x128xf32>
      %c0_12 = arith.constant 0 : index
      %c0_13 = arith.constant 0 : index
      %13 = vector.load %arg5[%c0_12, %c0_13] : memref<1x128xf32, #tpu.memory_space<vmem>>, vector<1x128xf32>
      %14 = vector.broadcast %13 : vector<1x128xf32> to vector<128x128xf32>
      %15 = arith.addf %12, %14 : vector<128x128xf32>
      %16 = arith.truncf %15 : vector<128x128xf32> to vector<128x128xbf16>
      %c0_14 = arith.constant 0 : index
      %c0_15 = arith.constant 0 : index
      %17 = vector.load %arg6[%c0_14, %c0_15] : memref<128x128xbf16, #tpu.memory_space<vmem>>, vector<128x128xbf16>
      tpu.vector_store %arg6[%c0_14, %c0_15], %16 {strides = array<i32>} : memref<128x128xbf16, #tpu.memory_space<vmem>>, vector<128x128xbf16>,
    } else {
    }
    return
  }
  func.func @transform_0(%arg0: i32, %arg1: i32, %arg2: i32) -> (i32, i32) {
    %c0_i32 = arith.constant 0 : i32
    return %arg0, %arg2 : i32, i32
  }
  func.func @transform_1(%arg0: i32, %arg1: i32, %arg2: i32) -> (i32, i32) {
    %c0_i32 = arith.constant 0 : i32
    return %arg2, %arg1 : i32, i32
  }
  func.func @transform_2(%arg0: i32, %arg1: i32, %arg2: i32) -> (i32, i32) {
    %c0_i32 = arith.constant 0 : i32
    %c0_i32_0 = arith.constant 0 : i32
    return %c0_i32, %arg1 : i32, i32
  }
  func.func @transform_3(%arg0: i32, %arg1: i32, %arg2: i32) -> (i32, i32) {
    %c0_i32 = arith.constant 0 : i32
    return %arg0, %arg1 : i32, i32
  }
}

</mosaic_0001>

<llo_original>
// kernel: tpu_custom_call.1
$region0: #{tpu_custom_call.1}
  #allocation0 [shape = 'u32[]', space=smem, size = 0x4, offset = 0x4, fixed_abs, tag = 'smem constant byte address 0x4 - core index']
  #allocation1 [shape = 'u32[72,128]{1,0:T(1,128)}', space=vmem, size = 0x9000, scoped, tag = 'internal scratch']
  #allocation2 [shape = 'f32[128,128]{1,0:T(8,128)}', space=vmem, size = 0x10000, scoped, tag = 'scratch operand']
  %s0 = inlined_call_operand.hbm [shape: bf16[128,128], index: 0, kind: input, shape index: {}]
  %s1 = inlined_call_operand.hbm [shape: bf16[128,128], index: 1, kind: input, shape index: {}]
  %s2 = inlined_call_operand.vmem [shape: f32[1,128], index: 2, kind: input, shape index: {}]
  %s3 = inlined_call_operand.hbm [shape: bf16[128,128], index: 3, kind: output, shape index: {}]
  %s4 = sld [smem:[#allocation0]]
  $region38: #{tpu_custom_call.1} parent=0
    _
  %s6 = ssub.s32 1, %s4
  %s7 = scalar_select 0, %s6, %s4
  $region1: #{tpu_custom_call.1} parent=0
    #allocation3 [shape = 'u8[32768]{0}', space=vmem, size = 0x8000, scoped, tag = 'input window, operand 0, single buffered']
    #allocation4 [shape = 's32[1]{0}', space=sflag, size = 0x4, scoped, tag = 'scoped memory for tpu_custom_call.1']
    #allocation5 [shape = 's32[1]{0}', space=sflag, size = 0x4, scoped, tag = 'scoped memory for tpu_custom_call.1']
    #allocation6 [shape = 'u8[32768]{0}', space=vmem, size = 0x8000, scoped, tag = 'input window, operand 1, single buffered']
    #allocation7 [shape = 's32[1]{0}', space=sflag, size = 0x4, scoped, tag = 'scoped memory for tpu_custom_call.1']
    #allocation8 [shape = 'u8[32768]{0}', space=vmem, size = 0x8000, scoped, tag = 'output window, operand 0, single buffered']
    %8 = vsyncpa [#allocation4], 0
    %9 = vsyncpa [#allocation7], 0
    %10 = vsyncpa [#allocation5], 0
    // Predicated region
    $region2: #{tpu_custom_call.1} parent=1 // pred_check
      _
    $region3: #{tpu_custom_call.1} parent=1 // pred_check_branch
      %12 = sbr.rel (0) target = $region5
    $region4: #{tpu_custom_call.1} parent=1 // pred_region
      %14 = vsyncadd [#allocation4], 0
      %s15 = sshll.u32 %s0, 4
      %s16 = int_to_ptr.hbm [resolvable:$true] %s15
      %s17 = sshll.u32 [#allocation3], 4
      %s18 = int_to_ptr.vmem [resolvable:$true] %s17
      %23 = dma.hbm_to_vmem [thread:$0]  %s16, 1024, %s18, [#allocation4], 64, 64, 4
    $region5: #{tpu_custom_call.1} parent=1 // pred_fallthru
      _
    // Predicated region
    $region6: #{tpu_custom_call.1} parent=1 // pred_check
      _
    $region7: #{tpu_custom_call.1} parent=1 // pred_check_branch
      %25 = sbr.rel (0) target = $region9
    $region8: #{tpu_custom_call.1} parent=1 // pred_region
      %27 = vsyncadd [#allocation7], 0
      %s28 = sshll.u32 %s1, 4
      %s29 = int_to_ptr.hbm [resolvable:$true] %s28
      %s30 = sshll.u32 [#allocation6], 4
      %s31 = int_to_ptr.vmem [resolvable:$true] %s30
      %36 = dma.hbm_to_vmem [thread:$0]  %s29, 1024, %s31, [#allocation7], 64, 64, 4
    $region9: #{tpu_custom_call.1} parent=1 // pred_fallthru
      _
    // Predicated region
    $region10: #{tpu_custom_call.1} parent=1 // pred_check
      _
    $region11: #{tpu_custom_call.1} parent=1 // pred_check_branch
      %38 = sbr.rel (0) target = $region13
    $region12: #{tpu_custom_call.1} parent=1 // pred_region
      _
    $region13: #{tpu_custom_call.1} parent=1 // pred_fallthru
      _
    // Predicated region
    $region14: #{tpu_custom_call.1} parent=1 // pred_check
      _
    $region15: #{tpu_custom_call.1} parent=1 // pred_check_branch
      %40 = sbr.rel (0) target = $region17
    $region16: #{tpu_custom_call.1} parent=1 // pred_region
      %42 = dma.done [#allocation4], 1024
    $region17: #{tpu_custom_call.1} parent=1 // pred_fallthru
      _
    // Predicated region
    $region18: #{tpu_custom_call.1} parent=1 // pred_check
      _
    $region19: #{tpu_custom_call.1} parent=1 // pred_check_branch
      %44 = sbr.rel (0) target = $region21
    $region20: #{tpu_custom_call.1} parent=1 // pred_region
      %46 = dma.done [#allocation7], 1024
    $region21: #{tpu_custom_call.1} parent=1 // pred_fallthru
      _
    %p47 = scmp.eq.s32.totalorder 0, 0
    // Predicated region
    $region22: #{tpu_custom_call.1} parent=1 // pred_check
      %p48 = pneg %p47
    $region23: #{tpu_custom_call.1} parent=1 // pred_check_branch
      %50 = sbr.rel (%p48) target = $region25
    $region24: #{tpu_custom_call.1} parent=1 // pred_region
      %51 = vst [vmem:[#allocation2] sm:$0xff] 0.0
      %52 = vst [vmem:[#allocation2 + $0x8] sm:$0xff] 0.0
      %53 = vst [vmem:[#allocation2 + $0x10] sm:$0xff] 0.0
      %54 = vst [vmem:[#allocation2 + $0x18] sm:$0xff] 0.0
      %55 = vst [vmem:[#allocation2 + $0x20] sm:$0xff] 0.0
      %56 = vst [vmem:[#allocation2 + $0x28] sm:$0xff] 0.0
      %57 = vst [vmem:[#allocation2 + $0x30] sm:$0xff] 0.0
      %58 = vst [vmem:[#allocation2 + $0x38] sm:$0xff] 0.0
      %59 = vst [vmem:[#allocation2 + $0x40] sm:$0xff] 0.0
      %60 = vst [vmem:[#allocation2 + $0x48] sm:$0xff] 0.0
      %61 = vst [vmem:[#allocation2 + $0x50] sm:$0xff] 0.0
      %62 = vst [vmem:[#allocation2 + $0x58] sm:$0xff] 0.0
      %63 = vst [vmem:[#allocation2 + $0x60] sm:$0xff] 0.0
      %64 = vst [vmem:[#allocation2 + $0x68] sm:$0xff] 0.0
      %65 = vst [vmem:[#allocation2 + $0x70] sm:$0xff] 0.0
      %66 = vst [vmem:[#allocation2 + $0x78] sm:$0xff] 0.0
    $region25: #{tpu_custom_call.1} parent=1 // pred_fallthru
      _
    %v67 = vld [vmem:[#allocation2] sm:$0xff]
    %v68 = vld [vmem:[#allocation2 + $0x8] sm:$0xff]
    %v69 = vld [vmem:[#allocation2 + $0x10] sm:$0xff]
    %v70 = vld [vmem:[#allocation2 + $0x18] sm:$0xff]
    %v71 = vld [vmem:[#allocation2 + $0x20] sm:$0xff]
    %v72 = vld [vmem:[#allocation2 + $0x28] sm:$0xff]
    %v73 = vld [vmem:[#allocation2 + $0x30] sm:$0xff]
    %v74 = vld [vmem:[#allocation2 + $0x38] sm:$0xff]
    %v75 = vld [vmem:[#allocation2 + $0x40] sm:$0xff]
    %v76 = vld [vmem:[#allocation2 + $0x48] sm:$0xff]
    %v77 = vld [vmem:[#allocation2 + $0x50] sm:$0xff]
    %v78 = vld [vmem:[#allocation2 + $0x58] sm:$0xff]
    %v79 = vld [vmem:[#allocation2 + $0x60] sm:$0xff]
    %v80 = vld [vmem:[#allocation2 + $0x68] sm:$0xff]
    %v81 = vld [vmem:[#allocation2 + $0x70] sm:$0xff]
    %v82 = vld [vmem:[#allocation2 + $0x78] sm:$0xff]
    %v83 = vld [vmem:[#allocation3] sm:$0xf]
    %v84 = vld [vmem:[#allocation3 + $0x4] sm:$0xf]
    %v85 = vld [vmem:[#allocation3 + $0x8] sm:$0xf]
    %v86 = vld [vmem:[#allocation3 + $0xc] sm:$0xf]
    %v87 = vld [vmem:[#allocation3 + $0x10] sm:$0xf]
    %v88 = vld [vmem:[#allocation3 + $0x14] sm:$0xf]
    %v89 = vld [vmem:[#allocation3 + $0x18] sm:$0xf]
    %v90 = vld [vmem:[#allocation3 + $0x1c] sm:$0xf]
    %v91 = vld [vmem:[#allocation3 + $0x20] sm:$0xf]
    %v92 = vld [vmem:[#allocation3 + $0x24] sm:$0xf]
    %v93 = vld [vmem:[#allocation3 + $0x28] sm:$0xf]
    %v94 = vld [vmem:[#allocation3 + $0x2c] sm:$0xf]
    %v95 = vld [vmem:[#allocation3 + $0x30] sm:$0xf]
    %v96 = vld [vmem:[#allocation3 + $0x34] sm:$0xf]
    %v97 = vld [vmem:[#allocation3 + $0x38] sm:$0xf]
    %v98 = vld [vmem:[#allocation3 + $0x3c] sm:$0xf]
    %v99 = vld [vmem:[#allocation6] sm:$0xf]
    %v100 = vld [vmem:[#allocation6 + $0x4] sm:$0xf]
    %v101 = vld [vmem:[#allocation6 + $0x8] sm:$0xf]
    %v102 = vld [vmem:[#allocation6 + $0xc] sm:$0xf]
    %v103 = vld [vmem:[#allocation6 + $0x10] sm:$0xf]
    %v104 = vld [vmem:[#allocation6 + $0x14] sm:$0xf]
    %v105 = vld [vmem:[#allocation6 + $0x18] sm:$0xf]
    %v106 = vld [vmem:[#allocation6 + $0x1c] sm:$0xf]
    %v107 = vld [vmem:[#allocation6 + $0x20] sm:$0xf]
    %v108 = vld [vmem:[#allocation6 + $0x24] sm:$0xf]
    %v109 = vld [vmem:[#allocation6 + $0x28] sm:$0xf]
    %v110 = vld [vmem:[#allocation6 + $0x2c] sm:$0xf]
    %v111 = vld [vmem:[#allocation6 + $0x30] sm:$0xf]
    %v112 = vld [vmem:[#allocation6 + $0x34] sm:$0xf]
    %v113 = vld [vmem:[#allocation6 + $0x38] sm:$0xf]
    %v114 = vld [vmem:[#allocation6 + $0x3c] sm:$0xf]
    %v131 = vunpack.c.l.b16 %v83
    %v132 = vunpack.c.l.b16 %v84
    %v133 = vunpack.c.l.b16 %v85
    %v134 = vunpack.c.l.b16 %v86
    %v135 = vunpack.c.l.b16 %v87
    %v136 = vunpack.c.l.b16 %v88
    %v137 = vunpack.c.l.b16 %v89
    %v138 = vunpack.c.l.b16 %v90
    %v139 = vunpack.c.l.b16 %v91
    %v140 = vunpack.c.l.b16 %v92
    %v141 = vunpack.c.l.b16 %v93
    %v142 = vunpack.c.l.b16 %v94
    %v143 = vunpack.c.l.b16 %v95
    %v144 = vunpack.c.l.b16 %v96
    %v145 = vunpack.c.l.b16 %v97
    %v146 = vunpack.c.l.b16 %v98
    %v147 = vpack.c.b16 %v132, %v131
    %v148 = vpack.c.b16 %v134, %v133
    %v149 = vpack.c.b16 %v136, %v135
    %v150 = vpack.c.b16 %v138, %v137
    %v151 = vpack.c.b16 %v140, %v139
    %v152 = vpack.c.b16 %v142, %v141
    %v153 = vpack.c.b16 %v144, %v143
    %v154 = vpack.c.b16 %v146, %v145
    %v179 = vunpack.c.l.b16 %v99
    %v180 = vunpack.c.l.b16 %v100
    %v181 = vunpack.c.l.b16 %v101
    %v182 = vunpack.c.l.b16 %v102
    %v183 = vunpack.c.l.b16 %v103
    %v184 = vunpack.c.l.b16 %v104
    %v185 = vunpack.c.l.b16 %v105
    %v186 = vunpack.c.l.b16 %v106
    %v187 = vunpack.c.l.b16 %v107
    %v188 = vunpack.c.l.b16 %v108
    %v189 = vunpack.c.l.b16 %v109
    %v190 = vunpack.c.l.b16 %v110
    %v191 = vunpack.c.l.b16 %v111
    %v192 = vunpack.c.l.b16 %v112
    %v193 = vunpack.c.l.b16 %v113
    %v194 = vunpack.c.l.b16 %v114
    %v195 = vpack.c.b16 %v180, %v179
    %v196 = vpack.c.b16 %v182, %v181
    %v197 = vpack.c.b16 %v184, %v183
    %v198 = vpack.c.b16 %v186, %v185
    %v199 = vpack.c.b16 %v188, %v187
    %v200 = vpack.c.b16 %v190, %v189
    %v201 = vpack.c.b16 %v192, %v191
    %v202 = vpack.c.b16 %v194, %v193
    %211 = vmatpush.bf16.msra.mxu0 %v202
    %212 = vmatpush.bf16.msra.mxu0 %v201
    %213 = vmatpush.bf16.msra.mxu0 %v200
    %214 = vmatpush.bf16.msra.mxu0 %v199
    %215 = vmatpush.bf16.msra.mxu0 %v198
    %216 = vmatpush.bf16.msra.mxu0 %v197
    %217 = vmatpush.bf16.msra.mxu0 %v196
    %218 = vmatpush.bf16.msra.mxu0 %v195
    %219 = vmatmul.bf16.gmra.mxu0 %v147
    %v220 = vpop.f32.mrf.mxu0
    %v221 = vadd.f32 0.0, %v220
    %v222 = vpop.f32.mrf.mxu0
    %v223 = vadd.f32 0.0, %v222
    %224 = vmatmul.bf16.gmra.mxu0 %v148
    %v225 = vpop.f32.mrf.mxu0
    %v226 = vadd.f32 0.0, %v225
    %v227 = vpop.f32.mrf.mxu0
    %v228 = vadd.f32 0.0, %v227
    %229 = vmatmul.bf16.gmra.mxu0 %v149
    %v230 = vpop.f32.mrf.mxu0
    %v231 = vadd.f32 0.0, %v230
    %v232 = vpop.f32.mrf.mxu0
    %v233 = vadd.f32 0.0, %v232
    %234 = vmatmul.bf16.gmra.mxu0 %v150
    %v235 = vpop.f32.mrf.mxu0
    %v236 = vadd.f32 0.0, %v235
    %v237 = vpop.f32.mrf.mxu0
    %v238 = vadd.f32 0.0, %v237
    %239 = vmatmul.bf16.gmra.mxu0 %v151
    %v240 = vpop.f32.mrf.mxu0
    %v241 = vadd.f32 0.0, %v240
    %v242 = vpop.f32.mrf.mxu0
    %v243 = vadd.f32 0.0, %v242
    %244 = vmatmul.bf16.gmra.mxu0 %v152
    %v245 = vpop.f32.mrf.mxu0
    %v246 = vadd.f32 0.0, %v245
    %v247 = vpop.f32.mrf.mxu0
    %v248 = vadd.f32 0.0, %v247
    %249 = vmatmul.bf16.gmra.mxu0 %v153
    %v250 = vpop.f32.mrf.mxu0
    %v251 = vadd.f32 0.0, %v250
    %v252 = vpop.f32.mrf.mxu0
    %v253 = vadd.f32 0.0, %v252
    %254 = vmatmul.bf16.gmra.mxu0 %v154
    %v255 = vpop.f32.mrf.mxu0
    %v256 = vadd.f32 0.0, %v255
    %v257 = vpop.f32.mrf.mxu0
    %v258 = vadd.f32 0.0, %v257
    %259 = vdwg.mxu0
    %v260 = vadd.f32 %v67, %v221
    %v261 = vadd.f32 %v68, %v223
    %v262 = vadd.f32 %v69, %v226
    %v263 = vadd.f32 %v70, %v228
    %v264 = vadd.f32 %v71, %v231
    %v265 = vadd.f32 %v72, %v233
    %v266 = vadd.f32 %v73, %v236
    %v267 = vadd.f32 %v74, %v238
    %v268 = vadd.f32 %v75, %v241
    %v269 = vadd.f32 %v76, %v243
    %v270 = vadd.f32 %v77, %v246
    %v271 = vadd.f32 %v78, %v248
    %v272 = vadd.f32 %v79, %v251
    %v273 = vadd.f32 %v80, %v253
    %v274 = vadd.f32 %v81, %v256
    %v275 = vadd.f32 %v82, %v258
    %276 = vst [vmem:[#allocation2] sm:$0xff] %v260
    %277 = vst [vmem:[#allocation2 + $0x8] sm:$0xff] %v261
    %278 = vst [vmem:[#allocation2 + $0x10] sm:$0xff] %v262
    %279 = vst [vmem:[#allocation2 + $0x18] sm:$0xff] %v263
    %280 = vst [vmem:[#allocation2 + $0x20] sm:$0xff] %v264
    %281 = vst [vmem:[#allocation2 + $0x28] sm:$0xff] %v265
    %282 = vst [vmem:[#allocation2 + $0x30] sm:$0xff] %v266
    %283 = vst [vmem:[#allocation2 + $0x38] sm:$0xff] %v267
    %284 = vst [vmem:[#allocation2 + $0x40] sm:$0xff] %v268
    %285 = vst [vmem:[#allocation2 + $0x48] sm:$0xff] %v269
    %286 = vst [vmem:[#allocation2 + $0x50] sm:$0xff] %v270
    %287 = vst [vmem:[#allocation2 + $0x58] sm:$0xff] %v271
    %288 = vst [vmem:[#allocation2 + $0x60] sm:$0xff] %v272
    %289 = vst [vmem:[#allocation2 + $0x68] sm:$0xff] %v273
    %290 = vst [vmem:[#allocation2 + $0x70] sm:$0xff] %v274
    %291 = vst [vmem:[#allocation2 + $0x78] sm:$0xff] %v275
    // Predicated region
    $region26: #{tpu_custom_call.1} parent=1 // pred_check
      %p292 = pneg %p47
    $region27: #{tpu_custom_call.1} parent=1 // pred_check_branch
      %294 = sbr.rel (%p292) target = $region29
    $region28: #{tpu_custom_call.1} parent=1 // pred_region
      %v295 = vld [vmem:[#allocation2] sm:$0xff]
      %v296 = vld [vmem:[#allocation2 + $0x8] sm:$0xff]
      %v297 = vld [vmem:[#allocation2 + $0x10] sm:$0xff]
      %v298 = vld [vmem:[#allocation2 + $0x18] sm:$0xff]
      %v299 = vld [vmem:[#allocation2 + $0x20] sm:$0xff]
      %v300 = vld [vmem:[#allocation2 + $0x28] sm:$0xff]
      %v301 = vld [vmem:[#allocation2 + $0x30] sm:$0xff]
      %v302 = vld [vmem:[#allocation2 + $0x38] sm:$0xff]
      %v303 = vld [vmem:[#allocation2 + $0x40] sm:$0xff]
      %v304 = vld [vmem:[#allocation2 + $0x48] sm:$0xff]
      %v305 = vld [vmem:[#allocation2 + $0x50] sm:$0xff]
      %v306 = vld [vmem:[#allocation2 + $0x58] sm:$0xff]
      %v307 = vld [vmem:[#allocation2 + $0x60] sm:$0xff]
      %v308 = vld [vmem:[#allocation2 + $0x68] sm:$0xff]
      %v309 = vld [vmem:[#allocation2 + $0x70] sm:$0xff]
      %v310 = vld [vmem:[#allocation2 + $0x78] sm:$0xff]
      %v311 = vld [vmem:[%s2] sm:$0x1]
      %v313 = vperm.slane %v311, 0
      %v315 = vadd.f32 %v295, %v313
      %v316 = vadd.f32 %v296, %v313
      %v317 = vadd.f32 %v297, %v313
      %v318 = vadd.f32 %v298, %v313
      %v319 = vadd.f32 %v299, %v313
      %v320 = vadd.f32 %v300, %v313
      %v321 = vadd.f32 %v301, %v313
      %v322 = vadd.f32 %v302, %v313
      %v323 = vadd.f32 %v303, %v313
      %v324 = vadd.f32 %v304, %v313
      %v325 = vadd.f32 %v305, %v313
      %v326 = vadd.f32 %v306, %v313
      %v327 = vadd.f32 %v307, %v313
      %v328 = vadd.f32 %v308, %v313
      %v329 = vadd.f32 %v309, %v313
      %v330 = vadd.f32 %v310, %v313
      %v331 = vpack.c.bf16 %v315, %v315
      %v332 = vpack.c.bf16 %v316, %v316
      %v333 = vpack.c.bf16 %v317, %v317
      %v334 = vpack.c.bf16 %v318, %v318
      %v335 = vpack.c.bf16 %v319, %v319
      %v336 = vpack.c.bf16 %v320, %v320
      %v337 = vpack.c.bf16 %v321, %v321
      %v338 = vpack.c.bf16 %v322, %v322
      %v339 = vpack.c.bf16 %v323, %v323
      %v340 = vpack.c.bf16 %v324, %v324
      %v341 = vpack.c.bf16 %v325, %v325
      %v342 = vpack.c.bf16 %v326, %v326
      %v343 = vpack.c.bf16 %v327, %v327
      %v344 = vpack.c.bf16 %v328, %v328
      %v345 = vpack.c.bf16 %v329, %v329
      %v346 = vpack.c.bf16 %v330, %v330
      %347 = vst [vmem:[#allocation8] sm:$0xf] %v331
      %348 = vst [vmem:[#allocation8 + $0x4] sm:$0xf] %v332
      %349 = vst [vmem:[#allocation8 + $0x8] sm:$0xf] %v333
      %350 = vst [vmem:[#allocation8 + $0xc] sm:$0xf] %v334
      %351 = vst [vmem:[#allocation8 + $0x10] sm:$0xf] %v335
      %352 = vst [vmem:[#allocation8 + $0x14] sm:$0xf] %v336
      %353 = vst [vmem:[#allocation8 + $0x18] sm:$0xf] %v337
      %354 = vst [vmem:[#allocation8 + $0x1c] sm:$0xf] %v338
      %355 = vst [vmem:[#allocation8 + $0x20] sm:$0xf] %v339
      %356 = vst [vmem:[#allocation8 + $0x24] sm:$0xf] %v340
      %357 = vst [vmem:[#allocation8 + $0x28] sm:$0xf] %v341
      %358 = vst [vmem:[#allocation8 + $0x2c] sm:$0xf] %v342
      %359 = vst [vmem:[#allocation8 + $0x30] sm:$0xf] %v343
      %360 = vst [vmem:[#allocation8 + $0x34] sm:$0xf] %v344
      %361 = vst [vmem:[#allocation8 + $0x38] sm:$0xf] %v345
      %362 = vst [vmem:[#allocation8 + $0x3c] sm:$0xf] %v346
    $region29: #{tpu_custom_call.1} parent=1 // pred_fallthru
      _
    // Predicated region
    $region30: #{tpu_custom_call.1} parent=1 // pred_check
      _
    $region31: #{tpu_custom_call.1} parent=1 // pred_check_branch
      %364 = sbr.rel (0) target = $region33
    $region32: #{tpu_custom_call.1} parent=1 // pred_region
      %366 = vsyncadd [#allocation5], 0
      %s367 = sshll.u32 [#allocation8], 4
      %s368 = int_to_ptr.vmem [resolvable:$true] %s367
      %s369 = sshll.u32 %s3, 4
      %s370 = int_to_ptr.hbm [resolvable:$true] %s369
      %375 = dma.vmem_to_hbm [thread:$0]  %s368, 1024, %s370, [#allocation5], 64, 64, 4
    $region33: #{tpu_custom_call.1} parent=1 // pred_fallthru
      _
    // Predicated region
    $region34: #{tpu_custom_call.1} parent=1 // pred_check
      _
    $region35: #{tpu_custom_call.1} parent=1 // pred_check_branch
      %377 = sbr.rel (0) target = $region37
    $region36: #{tpu_custom_call.1} parent=1 // pred_region
      %379 = dma.done [#allocation5], 1024
    $region37: #{tpu_custom_call.1} parent=1 // pred_fallthru
      _
    %380 = vsyncpa [#allocation4], 1
    %381 = vsyncpa [#allocation7], 1
    %382 = vsyncpa [#allocation5], 1

</llo_original>
